<compile_context>
chip_gen: v6e
topology: v6e:2x2x1
jax: 0.10.0
libtpu: 0.0.40
codegen_flags: <defaults>
</compile_context>

<pallas_src>
import functools

import jax
import jax.numpy as jnp
from jax.experimental import pallas as pl
from jax.experimental.pallas import tpu as pltpu


def _light_channel_attn_kernel(w1_ref, w2_ref, x_ref, o_ref):
    # w1_ref: VMEM (C, rd)   fc1 weight, transposed, with the 0.5 pool factor folded in
    # w2_ref: VMEM (rd, C)   fc2 weight, transposed
    # x_ref : VMEM (Nb, C, HW)   lane-dense block of images
    x = x_ref[...]                                                   # (Nb, C, HW), input dtype

    # Spatial pooling per (image, channel). 0.5 factors are already folded into w1.
    pool = (jnp.mean(x, axis=-1, dtype=jnp.float32)
            + jnp.max(x, axis=-1).astype(jnp.float32))               # (Nb, C) f32

    # Tiny channel MLP:  C -> rd -> C  (1x1 convs on a (N,C,1,1) tensor are matmuls).
    hidden = jnp.maximum(
        jnp.dot(pool, w1_ref[...], preferred_element_type=jnp.float32), 0.0)     # (Nb, rd)
    logits = jnp.dot(hidden, w2_ref[...], preferred_element_type=jnp.float32)     # (Nb, C)

    gate = jax.nn.sigmoid(logits).astype(x.dtype)                    # (Nb, C)
    o_ref[...] = (x * gate[:, :, None]).astype(o_ref.dtype)          # broadcast over HW


def light_channel_attn(x, fc1_w, fc2_w, *, block_batch=None):
    """LightChannelAttn forward.

    x:     (N, C, H, W)
    fc1_w: (rd, C, 1, 1)   Conv2d(C, rd, 1, bias=False) weight
    fc2_w: (C, rd, 1, 1)   Conv2d(rd, C, 1, bias=False) weight
    """
    N, C, H, W = x.shape
    rd = fc1_w.shape[0]
    HW = H * W

    # Fold the 0.5 pooling factor into fc1 (fc1 is linear), and lay the weights out
    # as (in_features, out_features) so the kernel does plain row-major dots.
    w1t = (0.5 * fc1_w.reshape(rd, C).T).astype(jnp.float32)         # (C, rd)
    w2t = fc2_w.reshape(C, rd).T.astype(jnp.float32)                 # (rd, C)

    # Lane-dense layout: spatial axis on lanes.
    x_flat = x.reshape(N, C, HW)

    # Batch several images per grid step so each block is ~1 MiB (double-buffered
    # in+out stays well under the default scoped VMEM on all generations).
    if block_batch is None:
        per_image_bytes = C * HW * x.dtype.itemsize
        target_bytes = 1 << 20
        block_batch = max(1, min(N, target_bytes // max(per_image_bytes, 1)))
    nb = block_batch
    grid = (pl.cdiv(N, nb),)

    out = pl.pallas_call(
        _light_channel_attn_kernel,
        out_shape=jax.ShapeDtypeStruct((N, C, HW), x.dtype),
        grid_spec=pltpu.PrefetchScalarGridSpec(
            num_scalar_prefetch=0,
            grid=grid,
            in_specs=[
                pl.BlockSpec((C, rd), lambda n: (0, 0)),             # fc1^T (0.5 folded)
                pl.BlockSpec((rd, C), lambda n: (0, 0)),             # fc2^T
                pl.BlockSpec((nb, C, HW), lambda n: (n, 0, 0)),      # Nb images / step
            ],
            out_specs=pl.BlockSpec((nb, C, HW), lambda n: (n, 0, 0)),
        ),
        compiler_params=pltpu.CompilerParams(
            dimension_semantics=("parallel",)),
    )(w1t, w2t, x_flat)

    return out.reshape(N, C, H, W)


def reference(x, fc1_w, fc2_w):
    """Pure-JAX reference matching the PyTorch module (eval mode, no bias)."""
    pool = (0.5 * jnp.mean(x, axis=(2, 3), keepdims=True)
            + 0.5 * jnp.max(x, axis=(2, 3), keepdims=True))          # (N, C, 1, 1)
    w1 = fc1_w.reshape(fc1_w.shape[0], -1)                           # (rd, C)
    w2 = fc2_w.reshape(fc2_w.shape[0], -1)                           # (C, rd)
    h = jnp.maximum(jnp.einsum('nchw,rc->nrhw', pool, w1), 0.0)
    attn = jnp.einsum('nrhw,cr->nchw', h, w2)
    return x * jax.nn.sigmoid(attn)


if __name__ == "__main__":
    key = jax.random.PRNGKey(0)
    kx, k1, k2 = jax.random.split(key, 3)

    N, C, H, W = 2, 32, 16, 16
    rd = max(1, C // 16)       # rd_ratio = 1/16, rd_divisor = 1  ->  rd = 2

    x = jax.random.normal(kx, (N, C, H, W), dtype=jnp.float32)
    fc1_w = 0.2 * jax.random.normal(k1, (rd, C, 1, 1), dtype=jnp.float32)
    fc2_w = 0.2 * jax.random.normal(k2, (C, rd, 1, 1), dtype=jnp.float32)

    out = light_channel_attn(x, fc1_w, fc2_w)
    out = jax.block_until_ready(out)

    ref = reference(x, fc1_w, fc2_w)
    assert out.shape == (N, C, H, W)
    err = jnp.max(jnp.abs(out - ref))
    assert jnp.allclose(out, ref, atol=1e-5, rtol=1e-5), f"max abs err {err}"

    print("KERNEL_OK")
</pallas_src>

<mosaic_0001>
module attributes {stable_mosaic.version = 11 : i64} {
  func.func @_light_channel_attn_kernel(%arg0: i32, %arg1: memref<32x2xf32, #tpu.memory_space<vmem>>, %arg2: memref<2x32xf32, #tpu.memory_space<vmem>>, %arg3: memref<2x32x256xf32, #tpu.memory_space<vmem>>, %arg4: memref<2x32x256xf32, #tpu.memory_space<vmem>>) attributes {dimension_semantics = [#tpu.dimension_semantics<parallel>], iteration_bounds = array<i64: 1>, scalar_prefetch = 0 : i64, scratch_operands = 0 : i64, tpu.core_type = #tpu.core_type<tc>, window_params = [{pipeline_mode = #tpu.pipeline_mode<synchronous>, transform_indices = @transform_0, window_bounds = array<i64: 32, 2>}, {pipeline_mode = #tpu.pipeline_mode<synchronous>, transform_indices = @transform_1, window_bounds = array<i64: 2, 32>}, {transform_indices = @transform_2, window_bounds = array<i64: 2, 32, 256>}, {transform_indices = @transform_3, window_bounds = array<i64: 2, 32, 256>}]} {
    %c0 = arith.constant 0 : index
    %c0_0 = arith.constant 0 : index
    %c0_1 = arith.constant 0 : index
    %0 = vector.load %arg3[%c0, %c0_0, %c0_1] : memref<2x32x256xf32, #tpu.memory_space<vmem>>, vector<2x32x256xf32>
    %cst = arith.constant dense<0.000000e+00> : vector<2x32xf32>
    %1 = vector.multi_reduction <add>, %0, %cst [2] : vector<2x32x256xf32> to vector<2x32xf32>
    %cst_2 = arith.constant 2.560000e+02 : f32
    %2 = vector.broadcast %cst_2 : f32 to vector<2x32xf32>
    %3 = arith.divf %1, %2 : vector<2x32xf32>
    %cst_3 = arith.constant dense<0xFF800000> : vector<2x32xf32>
    %4 = vector.multi_reduction <maximumf>, %0, %cst_3 [2] : vector<2x32x256xf32> to vector<2x32xf32>
    %5 = arith.addf %3, %4 : vector<2x32xf32>
    %c0_4 = arith.constant 0 : index
    %c0_5 = arith.constant 0 : index
    %6 = vector.load %arg1[%c0_4, %c0_5] : memref<32x2xf32, #tpu.memory_space<vmem>>, vector<32x2xf32>
    %cst_6 = arith.constant dense<0.000000e+00> : vector<2x2xf32>
    %7 = tpu.matmul %5, %6, %cst_6 {dimension_numbers = #tpu.dot_dimension_numbers<[1], [0], [0], [1], [0, 0, 1, 1], [], []>} : vector<2x32xf32>, vector<32x2xf32>, vector<2x2xf32> -> vector<2x2xf32>
    %cst_7 = arith.constant 0.000000e+00 : f32
    %8 = vector.broadcast %cst_7 : f32 to vector<2x2xf32>
    %9 = arith.maximumf %7, %8 : vector<2x2xf32>
    %c0_8 = arith.constant 0 : index
    %c0_9 = arith.constant 0 : index
    %10 = vector.load %arg2[%c0_8, %c0_9] : memref<2x32xf32, #tpu.memory_space<vmem>>, vector<2x32xf32>
    %cst_10 = arith.constant dense<0.000000e+00> : vector<2x32xf32>
    %11 = tpu.matmul %9, %10, %cst_10 {dimension_numbers = #tpu.dot_dimension_numbers<[1], [0], [0], [1], [0, 0, 1, 1], [], []>} : vector<2x2xf32>, vector<2x32xf32>, vector<2x32xf32> -> vector<2x32xf32>
    %12 = arith.negf %11 : vector<2x32xf32>
    %13 = math.exp %12 : vector<2x32xf32>
    %cst_11 = arith.constant 1.000000e+00 : f32
    %14 = vector.broadcast %cst_11 : f32 to vector<2x32xf32>
    %15 = arith.addf %14, %13 : vector<2x32xf32>
    %16 = arith.divf %14, %15 : vector<2x32xf32>
    %17 = vector.shape_cast %16 : vector<2x32xf32> to vector<2x32x1xf32>
    %18 = vector.broadcast %17 : vector<2x32x1xf32> to vector<2x32x256xf32>
    %19 = arith.mulf %0, %18 : vector<2x32x256xf32>
    %c0_12 = arith.constant 0 : index
    %c0_13 = arith.constant 0 : index
    %c0_14 = arith.constant 0 : index
    %20 = vector.load %arg4[%c0_12, %c0_13, %c0_14] : memref<2x32x256xf32, #tpu.memory_space<vmem>>, vector<2x32x256xf32>
    tpu.vector_store %arg4[%c0_12, %c0_13, %c0_14], %19 {strides = array<i32>} : memref<2x32x256xf32, #tpu.memory_space<vmem>>, vector<2x32x256xf32>,
    return
  }
  func.func @transform_0(%arg0: i32) -> (i32, i32) {
    %c0_i32 = arith.constant 0 : i32
    %c0_i32_0 = arith.constant 0 : i32
    %c0_i32_1 = arith.constant 0 : i32
    return %c0_i32, %c0_i32_0 : i32, i32
  }
  func.func @transform_1(%arg0: i32) -> (i32, i32) {
    %c0_i32 = arith.constant 0 : i32
    %c0_i32_0 = arith.constant 0 : i32
    %c0_i32_1 = arith.constant 0 : i32
    return %c0_i32, %c0_i32_0 : i32, i32
  }
  func.func @transform_2(%arg0: i32) -> (i32, i32, i32) {
    %c0_i32 = arith.constant 0 : i32
    %c0_i32_0 = arith.constant 0 : i32
    %c0_i32_1 = arith.constant 0 : i32
    return %arg0, %c0_i32, %c0_i32_0 : i32, i32, i32
  }
  func.func @transform_3(%arg0: i32) -> (i32, i32, i32) {
    %c0_i32 = arith.constant 0 : i32
    %c0_i32_0 = arith.constant 0 : i32
    %c0_i32_1 = arith.constant 0 : i32
    return %arg0, %c0_i32, %c0_i32_0 : i32, i32, i32
  }
}

</mosaic_0001>

<llo_original>
// kernel: tpu_custom_call.1
$region0: #{tpu_custom_call.1}
  #allocation0 [shape = 'u32[]', space=smem, size = 0x4, offset = 0x4, fixed_abs, tag = 'smem constant byte address 0x4 - core index']
  #allocation1 [shape = 'u32[144,128]{1,0:T(1,128)}', space=vmem, size = 0x12000, scoped, tag = 'internal scratch']
  %s0 = inlined_call_operand.vmem [shape: f32[32,2], index: 0, kind: input, shape index: {}]
  %s1 = inlined_call_operand.vmem [shape: f32[2,32], index: 1, kind: input, shape index: {}]
  %s2 = inlined_call_operand.hbm [shape: f32[2,32,256], index: 2, kind: input, shape index: {}]
  %s3 = inlined_call_operand.hbm [shape: f32[2,32,256], index: 3, kind: output, shape index: {}]
  %s4 = sld [smem:[#allocation0]]
  $region26: #{tpu_custom_call.1} parent=0
    _
  %s6 = ssub.s32 1, %s4
  %s7 = scalar_select 0, %s6, %s4
  $region1: #{tpu_custom_call.1} parent=0
    #allocation2 [shape = 'u8[65536]{0}', space=vmem, size = 0x10000, scoped, tag = 'input window, operand 2, single buffered']
    #allocation3 [shape = 's32[1]{0}', space=sflag, size = 0x4, scoped, tag = 'scoped memory for tpu_custom_call.1']
    #allocation4 [shape = 's32[1]{0}', space=sflag, size = 0x4, scoped, tag = 'scoped memory for tpu_custom_call.1']
    #allocation5 [shape = 'u8[65536]{0}', space=vmem, size = 0x10000, scoped, tag = 'output window, operand 0, single buffered']
    %8 = vsyncpa [#allocation3], 0
    %9 = vsyncpa [#allocation4], 0
    // Predicated region
    $region2: #{tpu_custom_call.1} parent=1 // pred_check
      _
    $region3: #{tpu_custom_call.1} parent=1 // pred_check_branch
      %11 = sbr.rel (0) target = $region5
    $region4: #{tpu_custom_call.1} parent=1 // pred_region
      _
    $region5: #{tpu_custom_call.1} parent=1 // pred_fallthru
      _
    // Predicated region
    $region6: #{tpu_custom_call.1} parent=1 // pred_check
      _
    $region7: #{tpu_custom_call.1} parent=1 // pred_check_branch
      %13 = sbr.rel (0) target = $region9
    $region8: #{tpu_custom_call.1} parent=1 // pred_region
      _
    $region9: #{tpu_custom_call.1} parent=1 // pred_fallthru
      _
    // Predicated region
    $region10: #{tpu_custom_call.1} parent=1 // pred_check
      _
    $region11: #{tpu_custom_call.1} parent=1 // pred_check_branch
      %15 = sbr.rel (0) target = $region13
    $region12: #{tpu_custom_call.1} parent=1 // pred_region
      %s17 = ssub.s32 2048, 2048
      %18 = vsyncadd [#allocation3], %s17
      %s19 = sshll.u32 [#allocation2], 4
      %s20 = int_to_ptr.vmem [resolvable:$true] %s19
      %25 = dma.hbm_to_vmem [thread:$0]  %s2, 2048, %s20, [#allocation3], 256, 256, 16
    $region13: #{tpu_custom_call.1} parent=1 // pred_fallthru
      _
    // Predicated region
    $region14: #{tpu_custom_call.1} parent=1 // pred_check
      _
    $region15: #{tpu_custom_call.1} parent=1 // pred_check_branch
      %27 = sbr.rel (0) target = $region17
    $region16: #{tpu_custom_call.1} parent=1 // pred_region
      %28 = dma.done [#allocation3], 2048
    $region17: #{tpu_custom_call.1} parent=1 // pred_fallthru
      _
    %v29 = vld [vmem:[#allocation2] sm:$0xff]
    %v30 = vld [vmem:[#allocation2 + $0x8] sm:$0xff]
    %v31 = vld [vmem:[#allocation2 + $0x10] sm:$0xff]
    %v32 = vld [vmem:[#allocation2 + $0x18] sm:$0xff]
    %v33 = vld [vmem:[#allocation2 + $0x20] sm:$0xff]
    %v34 = vld [vmem:[#allocation2 + $0x28] sm:$0xff]
    %v35 = vld [vmem:[#allocation2 + $0x30] sm:$0xff]
    %v36 = vld [vmem:[#allocation2 + $0x38] sm:$0xff]
    %v37 = vld [vmem:[#allocation2 + $0x40] sm:$0xff]
    %v38 = vld [vmem:[#allocation2 + $0x48] sm:$0xff]
    %v39 = vld [vmem:[#allocation2 + $0x50] sm:$0xff]
    %v40 = vld [vmem:[#allocation2 + $0x58] sm:$0xff]
    %v41 = vld [vmem:[#allocation2 + $0x60] sm:$0xff]
    %v42 = vld [vmem:[#allocation2 + $0x68] sm:$0xff]
    %v43 = vld [vmem:[#allocation2 + $0x70] sm:$0xff]
    %v44 = vld [vmem:[#allocation2 + $0x78] sm:$0xff]
    %v45 = vadd.f32 %v29, %v30
    %46 = vadd.xlane.f32.xlu0 %v45
    %v47 = vpop.xlane.xlu0 %46
    %v48 = vadd.f32 %v31, %v32
    %49 = vadd.xlane.f32.xlu0 %v48
    %v50 = vpop.xlane.xlu0 %49
    %v51 = vadd.f32 %v33, %v34
    %52 = vadd.xlane.f32.xlu0 %v51
    %v53 = vpop.xlane.xlu0 %52
    %v54 = vadd.f32 %v35, %v36
    %55 = vadd.xlane.f32.xlu0 %v54
    %v56 = vpop.xlane.xlu0 %55
    %v57 = vadd.f32 %v37, %v38
    %58 = vadd.xlane.f32.xlu0 %v57
    %v59 = vpop.xlane.xlu0 %58
    %v60 = vadd.f32 %v39, %v40
    %61 = vadd.xlane.f32.xlu0 %v60
    %v62 = vpop.xlane.xlu0 %61
    %v63 = vadd.f32 %v41, %v42
    %64 = vadd.xlane.f32.xlu0 %v63
    %v65 = vpop.xlane.xlu0 %64
    %v66 = vadd.f32 %v43, %v44
    %67 = vadd.xlane.f32.xlu0 %v66
    %v68 = vpop.xlane.xlu0 %67
    %v69 = vrcp.pop 256.0
    %v70 = vmul.f32 %v47, %v69
    %v71 = vmul.f32 %v50, %v69
    %v72 = vmul.f32 %v53, %v69
    %v73 = vmul.f32 %v56, %v69
    %v74 = vmul.f32 %v59, %v69
    %v75 = vmul.f32 %v62, %v69
    %v76 = vmul.f32 %v65, %v69
    %v77 = vmul.f32 %v68, %v69
    %v78 = vmax.f32 %v29, %v30
    %79 = vmax.xlane.f32.xlu0 %v78
    %v80 = vpop.xlane.xlu0 %79
    %v81 = vmax.f32 %v31, %v32
    %82 = vmax.xlane.f32.xlu0 %v81
    %v83 = vpop.xlane.xlu0 %82
    %v84 = vmax.f32 %v33, %v34
    %85 = vmax.xlane.f32.xlu0 %v84
    %v86 = vpop.xlane.xlu0 %85
    %v87 = vmax.f32 %v35, %v36
    %88 = vmax.xlane.f32.xlu0 %v87
    %v89 = vpop.xlane.xlu0 %88
    %v90 = vmax.f32 %v37, %v38
    %91 = vmax.xlane.f32.xlu0 %v90
    %v92 = vpop.xlane.xlu0 %91
    %v93 = vmax.f32 %v39, %v40
    %94 = vmax.xlane.f32.xlu0 %v93
    %v95 = vpop.xlane.xlu0 %94
    %v96 = vmax.f32 %v41, %v42
    %97 = vmax.xlane.f32.xlu0 %v96
    %v98 = vpop.xlane.xlu0 %97
    %v99 = vmax.f32 %v43, %v44
    %100 = vmax.xlane.f32.xlu0 %v99
    %v101 = vpop.xlane.xlu0 %100
    %v102 = vadd.f32 %v70, %v80
    %v103 = vadd.f32 %v71, %v83
    %v104 = vadd.f32 %v72, %v86
    %v105 = vadd.f32 %v73, %v89
    %v106 = vadd.f32 %v74, %v92
    %v107 = vadd.f32 %v75, %v95
    %v108 = vadd.f32 %v76, %v98
    %v109 = vadd.f32 %v77, %v101
    %v110 = vld [vmem:[%s0] sm:$0xff]
    %v111 = vld [vmem:[%s0 + $0x8] sm:$0xff]
    %v112 = vld [vmem:[%s0 + $0x10] sm:$0xff]
    %v113 = vld [vmem:[%s0 + $0x18] sm:$0xff]
    %v122 = vlaneseq
    %v123 = vand.u32 %v122, 127
    %v124 = vlaneseq
    %v125 = vshrl.u32 %v124, 7
    %v126 = vsub.s32 %v123, %v125
    %v127 = vrot.slane %v102, %v126
    %v128 = vadd.s32 %v123, 4294967288
    %v129 = vlaneseq
    %v130 = vshrl.u32 %v129, 7
    %v131 = vsub.s32 %v128, %v130
    %v132 = vrot.slane %v103, %v131
    %vm133 = vcmask 130112
    %v134 = vsel %vm133, %v132, %v127
    %v135 = vadd.s32 %v123, 4294967280
    %v136 = vlaneseq
    %v137 = vshrl.u32 %v136, 7
    %v138 = vsub.s32 %v135, %v137
    %v139 = vrot.slane %v104, %v138
    %vm140 = vcmask 195712
    %v141 = vsel %vm140, %v139, %v134
    %v142 = vadd.s32 %v123, 4294967272
    %v143 = vlaneseq
    %v144 = vshrl.u32 %v143, 7
    %v145 = vsub.s32 %v142, %v144
    %v146 = vrot.slane %v105, %v145
    %vm147 = vcmask 261312
    %v148 = vsel %vm147, %v146, %v141
    %v149 = vlaneseq
    %v150 = vshrl.u32 %v149, 7
    %v151 = vsub.s32 %v123, %v150
    %v152 = vrot.slane %v106, %v151
    %v153 = vlaneseq
    %v154 = vshrl.u32 %v153, 7
    %v155 = vsub.s32 %v128, %v154
    %v156 = vrot.slane %v107, %v155
    %v157 = vsel %vm133, %v156, %v152
    %v158 = vlaneseq
    %v159 = vshrl.u32 %v158, 7
    %v160 = vsub.s32 %v135, %v159
    %v161 = vrot.slane %v108, %v160
    %v162 = vsel %vm140, %v161, %v157
    %v163 = vlaneseq
    %v164 = vshrl.u32 %v163, 7
    %v165 = vsub.s32 %v142, %v164
    %v166 = vrot.slane %v109, %v165
    %v167 = vsel %vm147, %v166, %v162
    %vm168 = vcmask 1041409
    %v169 = vsel %vm168, %v167, %v148
    %vm170 = vcmask 261120
    %v171 = vsel %vm170, %v169, 0
    %173 = vmatprep.subr.mxu0 0.0
    %174 = vmatpush1.msra.mxu0 0.0
    %175 = vmatprep.subr.mxu0 0.0
    %176 = vmatpush1.msra.mxu0 0.0
    %177 = vmatprep.subr.mxu0 0.0
    %178 = vmatpush1.msra.mxu0 0.0
    %179 = vmatprep.subr.mxu0 0.0
    %180 = vmatpush1.msra.mxu0 0.0
    %181 = vmatprep.subr.mxu0 0.0
    %182 = vmatpush1.msra.mxu0 0.0
    %183 = vmatprep.subr.mxu0 0.0
    %184 = vmatpush1.msra.mxu0 0.0
    %185 = vmatprep.subr.mxu0 0.0
    %186 = vmatpush1.msra.mxu0 0.0
    %187 = vmatprep.subr.mxu0 0.0
    %188 = vmatpush1.msra.mxu0 0.0
    %189 = vmatprep.subr.mxu0 0.0
    %190 = vmatpush1.msra.mxu0 0.0
    %191 = vmatprep.subr.mxu0 0.0
    %192 = vmatpush1.msra.mxu0 0.0
    %193 = vmatprep.subr.mxu0 0.0
    %194 = vmatpush1.msra.mxu0 0.0
    %195 = vmatprep.subr.mxu0 0.0
    %196 = vmatpush1.msra.mxu0 0.0
    %197 = vmatprep.subr.mxu0 0.0
    %198 = vmatpush1.msra.mxu0 %v113
    %199 = vmatprep.subr.mxu0 0.0
    %200 = vmatpush1.msra.mxu0 %v112
    %201 = vmatprep.subr.mxu0 0.0
    %202 = vmatpush1.msra.mxu0 %v111
    %203 = vmatprep.subr.mxu0 0.0
    %204 = vmatpush1.msra.mxu0 %v110
    %205 = vmatprep.subr.mxu0 0.0
    %206 = vmatpush2.msra.mxu0 0.0
    %207 = vmatprep.subr.mxu0 0.0
    %208 = vmatpush2.msra.mxu0 0.0
    %209 = vmatprep.subr.mxu0 0.0
    %210 = vmatpush2.msra.mxu0 0.0
    %211 = vmatprep.subr.mxu0 0.0
    %212 = vmatpush2.msra.mxu0 0.0
    %213 = vmatprep.subr.mxu0 0.0
    %214 = vmatpush2.msra.mxu0 0.0
    %215 = vmatprep.subr.mxu0 0.0
    %216 = vmatpush2.msra.mxu0 0.0
    %217 = vmatprep.subr.mxu0 0.0
    %218 = vmatpush2.msra.mxu0 0.0
    %219 = vmatprep.subr.mxu0 0.0
    %220 = vmatpush2.msra.mxu0 0.0
    %221 = vmatprep.subr.mxu0 0.0
    %222 = vmatpush2.msra.mxu0 0.0
    %223 = vmatprep.subr.mxu0 0.0
    %224 = vmatpush2.msra.mxu0 0.0
    %225 = vmatprep.subr.mxu0 0.0
    %226 = vmatpush2.msra.mxu0 0.0
    %227 = vmatprep.subr.mxu0 0.0
    %228 = vmatpush2.msra.mxu0 0.0
    %229 = vmatprep.subr.mxu0 0.0
    %230 = vmatpush2.msra.mxu0 0.0
    %231 = vmatprep.subr.mxu0 0.0
    %232 = vmatpush2.msra.mxu0 0.0
    %233 = vmatprep.subr.mxu0 0.0
    %234 = vmatpush2.msra.mxu0 0.0
    %235 = vmatprep.subr.mxu0 0.0
    %236 = vmatpush2.msra.mxu0 0.0
    %237 = vmatprep.mubr.f32.mxu0 0.0
    %238 = vmatmul.mubr.f32.gmra.mxu0 %v171
    %v239 = vpop.f32.mrf.mxu0
    %v240 = vadd.f32 0.0, %v239
    %v241 = vpop.f32.mrf.mxu0
    %242 = vdwg.mxu0
    %v243 = vmax.f32 %v240, 0.0
    %v244 = vld [vmem:[%s1] sm:$0x3]
    %vm245 = vcmask 15360
    %v247 = vsel %vm245, %v243, 0
    %vm249 = vcmask 1041408
    %v251 = vsel %vm249, %v244, 0
    %253 = vmatprep.subr.mxu0 0.0
    %254 = vmatpush1.msra.mxu0 0.0
    %255 = vmatprep.subr.mxu0 0.0
    %256 = vmatpush1.msra.mxu0 0.0
    %257 = vmatprep.subr.mxu0 0.0
    %258 = vmatpush1.msra.mxu0 0.0
    %259 = vmatprep.subr.mxu0 0.0
    %260 = vmatpush1.msra.mxu0 0.0
    %261 = vmatprep.subr.mxu0 0.0
    %262 = vmatpush1.msra.mxu0 0.0
    %263 = vmatprep.subr.mxu0 0.0
    %264 = vmatpush1.msra.mxu0 0.0
    %265 = vmatprep.subr.mxu0 0.0
    %266 = vmatpush1.msra.mxu0 0.0
    %267 = vmatprep.subr.mxu0 0.0
    %268 = vmatpush1.msra.mxu0 0.0
    %269 = vmatprep.subr.mxu0 0.0
    %270 = vmatpush1.msra.mxu0 0.0
    %271 = vmatprep.subr.mxu0 0.0
    %272 = vmatpush1.msra.mxu0 0.0
    %273 = vmatprep.subr.mxu0 0.0
    %274 = vmatpush1.msra.mxu0 0.0
    %275 = vmatprep.subr.mxu0 0.0
    %276 = vmatpush1.msra.mxu0 0.0
    %277 = vmatprep.subr.mxu0 0.0
    %278 = vmatpush1.msra.mxu0 0.0
    %279 = vmatprep.subr.mxu0 0.0
    %280 = vmatpush1.msra.mxu0 0.0
    %281 = vmatprep.subr.mxu0 0.0
    %282 = vmatpush1.msra.mxu0 0.0
    %283 = vmatprep.subr.mxu0 0.0
    %284 = vmatpush1.msra.mxu0 %v251
    %285 = vmatprep.subr.mxu0 0.0
    %286 = vmatpush2.msra.mxu0 0.0
    %287 = vmatprep.subr.mxu0 0.0
    %288 = vmatpush2.msra.mxu0 0.0
    %289 = vmatprep.subr.mxu0 0.0
    %290 = vmatpush2.msra.mxu0 0.0
    %291 = vmatprep.subr.mxu0 0.0
    %292 = vmatpush2.msra.mxu0 0.0
    %293 = vmatprep.subr.mxu0 0.0
    %294 = vmatpush2.msra.mxu0 0.0
    %295 = vmatprep.subr.mxu0 0.0
    %296 = vmatpush2.msra.mxu0 0.0
    %297 = vmatprep.subr.mxu0 0.0
    %298 = vmatpush2.msra.mxu0 0.0
    %299 = vmatprep.subr.mxu0 0.0
    %300 = vmatpush2.msra.mxu0 0.0
    %301 = vmatprep.subr.mxu0 0.0
    %302 = vmatpush2.msra.mxu0 0.0
    %303 = vmatprep.subr.mxu0 0.0
    %304 = vmatpush2.msra.mxu0 0.0
    %305 = vmatprep.subr.mxu0 0.0
    %306 = vmatpush2.msra.mxu0 0.0
    %307 = vmatprep.subr.mxu0 0.0
    %308 = vmatpush2.msra.mxu0 0.0
    %309 = vmatprep.subr.mxu0 0.0
    %310 = vmatpush2.msra.mxu0 0.0
    %311 = vmatprep.subr.mxu0 0.0
    %312 = vmatpush2.msra.mxu0 0.0
    %313 = vmatprep.subr.mxu0 0.0
    %314 = vmatpush2.msra.mxu0 0.0
    %315 = vmatprep.subr.mxu0 0.0
    %316 = vmatpush2.msra.mxu0 0.0
    %317 = vmatprep.mubr.f32.mxu0 0.0
    %318 = vmatmul.mubr.f32.gmra.mxu0 %v247
    %v319 = vpop.f32.mrf.mxu0
    %v320 = vadd.f32 0.0, %v319
    %v321 = vpop.f32.mrf.mxu0
    %322 = vdwg.mxu0
    %v323 = vxor.u32 %v320, 2147483648
    %v324 = vmul.f32 %v323, 1.442695
    %v325 = vpow.pop %v324
    %v326 = vadd.f32 %v325, 1.0
    %v327 = vrcp.pop %v326
    %v328 = vmul.f32 1.0, %v327
    %v329 = vlaneseq
    %v330 = vshrl.u32 %v329, 7
    %v331 = vsub.s32 0, %v330
    %v332 = vrot.slane %v328, %v331
    %334 = vbcast.lane.b32.xlu0 %v332, 256
    %v335 = vpop.permute.xlu0 %334
    %s337 = sor.u32 256, 8
    %338 = vbcast.lane.b32.xlu0 %v332, %s337
    %v339 = vpop.permute.xlu0 %338
    %s341 = sor.u32 256, 16
    %342 = vbcast.lane.b32.xlu0 %v332, %s341
    %v343 = vpop.permute.xlu0 %342
    %s345 = sor.u32 256, 24
    %346 = vbcast.lane.b32.xlu0 %v332, %s345
    %v347 = vpop.permute.xlu0 %346
    %v348 = vlaneseq
    %v349 = vshrl.u32 %v348, 7
    %v350 = vsub.s32 1, %v349
    %v351 = vrot.slane %v328, %v350
    %353 = vbcast.lane.b32.xlu0 %v351, 256
    %v354 = vpop.permute.xlu0 %353
    %s356 = sor.u32 256, 8
    %357 = vbcast.lane.b32.xlu0 %v351, %s356
    %v358 = vpop.permute.xlu0 %357
    %s360 = sor.u32 256, 16
    %361 = vbcast.lane.b32.xlu0 %v351, %s360
    %v362 = vpop.permute.xlu0 %361
    %s364 = sor.u32 256, 24
    %365 = vbcast.lane.b32.xlu0 %v351, %s364
    %v366 = vpop.permute.xlu0 %365
    %v367 = vmul.f32 %v29, %v335
    %v368 = vmul.f32 %v30, %v335
    %v369 = vmul.f32 %v31, %v339
    %v370 = vmul.f32 %v32, %v339
    %v371 = vmul.f32 %v33, %v343
    %v372 = vmul.f32 %v34, %v343
    %v373 = vmul.f32 %v35, %v347
    %v374 = vmul.f32 %v36, %v347
    %v375 = vmul.f32 %v37, %v354
    %v376 = vmul.f32 %v38, %v354
    %v377 = vmul.f32 %v39, %v358
    %v378 = vmul.f32 %v40, %v358
    %v379 = vmul.f32 %v41, %v362
    %v380 = vmul.f32 %v42, %v362
    %v381 = vmul.f32 %v43, %v366
    %v382 = vmul.f32 %v44, %v366
    %383 = vst [vmem:[#allocation5] sm:$0xff] %v367
    %384 = vst [vmem:[#allocation5 + $0x8] sm:$0xff] %v368
    %385 = vst [vmem:[#allocation5 + $0x10] sm:$0xff] %v369
    %386 = vst [vmem:[#allocation5 + $0x18] sm:$0xff] %v370
    %387 = vst [vmem:[#allocation5 + $0x20] sm:$0xff] %v371
    %388 = vst [vmem:[#allocation5 + $0x28] sm:$0xff] %v372
    %389 = vst [vmem:[#allocation5 + $0x30] sm:$0xff] %v373
    %390 = vst [vmem:[#allocation5 + $0x38] sm:$0xff] %v374
    %391 = vst [vmem:[#allocation5 + $0x40] sm:$0xff] %v375
    %392 = vst [vmem:[#allocation5 + $0x48] sm:$0xff] %v376
    %393 = vst [vmem:[#allocation5 + $0x50] sm:$0xff] %v377
    %394 = vst [vmem:[#allocation5 + $0x58] sm:$0xff] %v378
    %395 = vst [vmem:[#allocation5 + $0x60] sm:$0xff] %v379
    %396 = vst [vmem:[#allocation5 + $0x68] sm:$0xff] %v380
    %397 = vst [vmem:[#allocation5 + $0x70] sm:$0xff] %v381
    %398 = vst [vmem:[#allocation5 + $0x78] sm:$0xff] %v382
    // Predicated region
    $region18: #{tpu_custom_call.1} parent=1 // pred_check
      _
    $region19: #{tpu_custom_call.1} parent=1 // pred_check_branch
      %400 = sbr.rel (0) target = $region21
    $region20: #{tpu_custom_call.1} parent=1 // pred_region
      %s402 = ssub.s32 2048, 2048
      %403 = vsyncadd [#allocation4], %s402
      %s404 = sshll.u32 [#allocation5], 4
      %s405 = int_to_ptr.vmem [resolvable:$true] %s404
      %410 = dma.vmem_to_hbm [thread:$0]  %s405, 2048, %s3, [#allocation4], 256, 256, 16
    $region21: #{tpu_custom_call.1} parent=1 // pred_fallthru
      _
    // Predicated region
    $region22: #{tpu_custom_call.1} parent=1 // pred_check
      _
    $region23: #{tpu_custom_call.1} parent=1 // pred_check_branch
      %412 = sbr.rel (0) target = $region25
    $region24: #{tpu_custom_call.1} parent=1 // pred_region
      %413 = dma.done [#allocation4], 2048
    $region25: #{tpu_custom_call.1} parent=1 // pred_fallthru
      _
    %414 = vsyncpa [#allocation3], 1
    %415 = vsyncpa [#allocation4], 1

</llo_original>
